<compile_context>
chip_gen: v5e
topology: v5e:2x2
jax: 0.10.0
libtpu: 0.0.40
codegen_flags: <defaults>
</compile_context>

<pallas_src>
import functools

import numpy as np
import jax
import jax.numpy as jnp
from jax.experimental import pallas as pl
from jax.experimental.pallas import tpu as pltpu


# Rows (of 128 lanes) per tile -> 512 KiB per f32 buffer. Must be a multiple of 8.
_DEFAULT_ROW_TILE = 1024


def _add_kernel(x_ref, pos_ref, o_ref):
    # Eval mode: dropout is the identity.
    o_ref[...] = (x_ref[...] + pos_ref[...]).astype(o_ref.dtype)


def _make_add_dropout_kernel(drop_p: float):
    """Kernel closed over the (static) dropout probability."""
    # keep  <=>  uniform u32 bits >= drop_p * 2^32   (integer threshold compare)
    thresh = np.uint32(min(int(round(drop_p * float(1 << 32))), (1 << 32) - 1))
    inv_keep = 1.0 / (1.0 - drop_p)

    def kernel(x_ref, pos_ref, bits_ref, o_ref):
        y = x_ref[...] + pos_ref[...]
        keep = bits_ref[...] >= thresh
        o_ref[...] = (jnp.where(keep, y, 0.0) * inv_keep).astype(o_ref.dtype)

    return kernel


@functools.partial(jax.jit, static_argnames=("drop_p", "row_tile"))
def position_embeddings_fwd(x, pos_emb, rng_key=None, *, drop_p: float = 0.0,
                            row_tile: int = _DEFAULT_ROW_TILE):
    """x: (B, S, E); pos_emb: (1, max_seq, E). Returns (B, S, E)."""
    b, s, e = x.shape
    _, max_s, e_p = pos_emb.shape
    assert e_p == e and max_s >= s
    assert row_tile % 8 == 0
    n = s * e

    use_dropout = drop_p > 0.0
    if use_dropout:
        if rng_key is None:
            raise ValueError("rng_key is required when drop_p > 0")
        # Dropout randomness generated outside the kernel (portable: works on
        # TPU and under the Pallas CPU interpreter; pltpu.prng_* are TPU-only).
        bits = jax.random.bits(rng_key, (b, s, e), dtype=jnp.uint32)
    else:
        bits = None

    # --- pick a lane-dense layout when possible -----------------------------
    if n % 128 == 0:
        lanes = 128
        rows = n // lanes
        x3 = x.reshape(b, rows, lanes)
        bits3 = bits.reshape(b, rows, lanes) if use_dropout else None
        pos_full_ok = (max_s * e) % lanes == 0
        pos_full = (pos_emb.reshape(1, (max_s * e) // lanes, lanes)
                    if pos_full_ok else None)
    else:
        # Fallback: keep (B, S, E); last dim equals the full array dim.
        lanes = e
        rows = s
        x3 = x
        bits3 = bits
        pos_full_ok = True
        pos_full = pos_emb  # only the first `s` rows are ever addressed

    # --- tile the row axis ---------------------------------------------------
    ts = rows if rows <= row_tile else row_tile  # ts is full-dim or multiple of 8

    if ts % 8 == 0 and pos_full_ok:
        # Use the full table; the BlockSpec DMA touches only the needed rows.
        pos3 = pos_full
    else:
        # Small/irregular case: slice to the exact extent so the block shape
        # equals the full array dims (satisfies the (8,128) block rule).
        if n % 128 == 0:
            pos3 = jax.lax.slice(pos_emb.reshape(1, max_s * e), (0, 0),
                                 (1, n)).reshape(1, rows, lanes)
        else:
            pos3 = pos_emb[:, :s, :]

    num_tiles = pl.cdiv(rows, ts)
    # Row tiles outer, batch inner: pos block index is constant along the
    # inner axis, so the positional tile is not re-fetched per batch element.
    grid = (num_tiles, b)

    data_spec = pl.BlockSpec((1, ts, lanes), lambda t, i: (i, t, 0))
    pos_spec = pl.BlockSpec((1, ts, lanes), lambda t, i: (0, t, 0))

    compiler_params = pltpu.CompilerParams(
        dimension_semantics=("parallel", "parallel"))

    out_shape = jax.ShapeDtypeStruct((b, rows, lanes), x.dtype)

    if use_dropout:
        out3 = pl.pallas_call(
            _make_add_dropout_kernel(float(drop_p)),
            out_shape=out_shape,
            grid=grid,
            in_specs=[data_spec, pos_spec, data_spec],
            out_specs=data_spec,
            compiler_params=compiler_params,
        )(x3, pos3, bits3)
    else:
        out3 = pl.pallas_call(
            _add_kernel,
            out_shape=out_shape,
            grid=grid,
            in_specs=[data_spec, pos_spec],
            out_specs=data_spec,
            compiler_params=compiler_params,
        )(x3, pos3)

    return out3.reshape(b, s, e)


if __name__ == "__main__":
    # Config implied by the module: max_short_seq_len, n_embd, embd_pdrop.
    batch = 2
    seq_len = 8
    n_embd = 32
    max_short_seq_len = 16
    embd_pdrop = 0.1

    key = jax.random.PRNGKey(0)
    kx, kp, kd = jax.random.split(key, 3)

    x = jax.random.normal(kx, (batch, seq_len, n_embd), dtype=jnp.float32)
    # nn.Parameter(torch.zeros(...)) in the module; use a small deterministic
    # init here so the add is non-trivial to test.
    pos_emb = 0.02 * jax.random.normal(
        kp, (1, max_short_seq_len, n_embd), dtype=jnp.float32
    )

    ref = x + pos_emb[:, :seq_len, :]

    # Eval mode (dropout = identity): must equal x + pos_emb[:, :seq_len, :].
    out_eval = jax.block_until_ready(
        position_embeddings_fwd(x, pos_emb, drop_p=0.0))
    assert out_eval.shape == (batch, seq_len, n_embd)
    assert jnp.allclose(out_eval, ref, atol=1e-6, rtol=1e-6)

    # Training mode (inverted dropout), deterministic given the rng key.
    out_train = jax.block_until_ready(
        position_embeddings_fwd(x, pos_emb, kd, drop_p=embd_pdrop))
    assert out_train.shape == (batch, seq_len, n_embd)
    scaled_ref = ref / (1.0 - embd_pdrop)
    is_dropped = jnp.isclose(out_train, 0.0)
    is_kept = jnp.isclose(out_train, scaled_ref, atol=1e-5)
    assert bool(jnp.all(jnp.logical_or(is_dropped, is_kept)))
    assert bool(jnp.any(is_dropped))            # some elements were dropped
    assert bool(jnp.any(out_train != 0.0))      # not everything was dropped

    print("KERNEL_OK")
</pallas_src>

<mosaic_0001>
module attributes {stable_mosaic.version = 11 : i64} {
  func.func @_add_kernel(%arg0: i32, %arg1: i32, %arg2: memref<1x2x128xf32, #tpu.memory_space<vmem>>, %arg3: memref<1x2x128xf32, #tpu.memory_space<vmem>>, %arg4: memref<1x2x128xf32, #tpu.memory_space<vmem>>) attributes {dimension_semantics = [#tpu.dimension_semantics<parallel>, #tpu.dimension_semantics<parallel>], iteration_bounds = array<i64: 1, 2>, scalar_prefetch = 0 : i64, scratch_operands = 0 : i64, tpu.core_type = #tpu.core_type<tc>, window_params = [{transform_indices = @transform_0, window_bounds = array<i64: 1, 2, 128>}, {transform_indices = @transform_1, window_bounds = array<i64: 1, 2, 128>}, {transform_indices = @transform_2, window_bounds = array<i64: 1, 2, 128>}]} {
    %c0 = arith.constant 0 : index
    %c0_0 = arith.constant 0 : index
    %c0_1 = arith.constant 0 : index
    %0 = vector.load %arg2[%c0, %c0_0, %c0_1] : memref<1x2x128xf32, #tpu.memory_space<vmem>>, vector<1x2x128xf32>
    %c0_2 = arith.constant 0 : index
    %c0_3 = arith.constant 0 : index
    %c0_4 = arith.constant 0 : index
    %1 = vector.load %arg3[%c0_2, %c0_3, %c0_4] : memref<1x2x128xf32, #tpu.memory_space<vmem>>, vector<1x2x128xf32>
    %2 = arith.addf %0, %1 : vector<1x2x128xf32>
    %c0_5 = arith.constant 0 : index
    %c0_6 = arith.constant 0 : index
    %c0_7 = arith.constant 0 : index
    %3 = vector.load %arg4[%c0_5, %c0_6, %c0_7] : memref<1x2x128xf32, #tpu.memory_space<vmem>>, vector<1x2x128xf32>
    tpu.vector_store %arg4[%c0_5, %c0_6, %c0_7], %2 {strides = array<i32>} : memref<1x2x128xf32, #tpu.memory_space<vmem>>, vector<1x2x128xf32>,
    return
  }
  func.func @transform_0(%arg0: i32, %arg1: i32) -> (i32, i32, i32) {
    %c0_i32 = arith.constant 0 : i32
    %c0_i32_0 = arith.constant 0 : i32
    return %arg1, %arg0, %c0_i32 : i32, i32, i32
  }
  func.func @transform_1(%arg0: i32, %arg1: i32) -> (i32, i32, i32) {
    %c0_i32 = arith.constant 0 : i32
    %c0_i32_0 = arith.constant 0 : i32
    %c0_i32_1 = arith.constant 0 : i32
    return %c0_i32, %arg0, %c0_i32_0 : i32, i32, i32
  }
  func.func @transform_2(%arg0: i32, %arg1: i32) -> (i32, i32, i32) {
    %c0_i32 = arith.constant 0 : i32
    %c0_i32_0 = arith.constant 0 : i32
    return %arg1, %arg0, %c0_i32 : i32, i32, i32
  }
}

</mosaic_0001>

<llo_original>
// kernel: position_embeddings_fwd.1
$region0: #{position_embeddings_fwd.1}
  #allocation0 [shape = 'u32[]', space=smem, size = 0x4, offset = 0x4, fixed_abs, tag = 'smem constant byte address 0x4 - core index']
  #allocation1 [shape = 'u32[72,128]{1,0:T(1,128)}', space=vmem, size = 0x9000, scoped, tag = 'internal scratch']
  %s0 = inlined_call_operand.vmem [shape: f32[2,2,128], index: 0, kind: input, shape index: {}]
  %s1 = inlined_call_operand.vmem [shape: f32[1,2,128], index: 1, kind: input, shape index: {}]
  %s2 = inlined_call_operand.vmem [shape: f32[2,2,128], index: 2, kind: output, shape index: {}]
  %s3 = sld [smem:[#allocation0]]
  $region41: #{position_embeddings_fwd.1} parent=0
    _
  %s5 = ssub.s32 1, %s3
  %s6 = scalar_select 0, %s5, %s3
  loop: start=0, step=1, limit=4
  $region2: #{position_embeddings_fwd.1} parent=0 // loop_pre_header
    _
  $region3: #{position_embeddings_fwd.1} parent=0 // loop_header
    %s8 = sphi 0, %s12
    %p9 = scmp.ge.s32.totalorder %s8, 4
    %s15 = sphi 0, %s27
    %s16 = sphi 0, %s23
    %s17 = sphi 0, %s15
    %s18 = sphi 0, %s16
    %s19 = sphi 0, %s17
    %s20 = sphi 0, %s18
    %s32 = sphi 0, %s34
    %s35 = sphi 0, %s32
    %s36 = sphi 0, %s35
    %s52 = sphi 0, %s36
    %s58 = sphi 0, %s60
    %s61 = sphi 0, %s58
    %s62 = sphi 0, %s61
    %s78 = sphi 0, %s62
    %s86 = sphi 0, %s88
    %s89 = sphi 0, %s86
    %s90 = sphi 0, %s89
    %s106 = sphi 0, %s90
  $region4: #{position_embeddings_fwd.1} parent=0 // loop_header_branch
    %11 = sbr.rel (%p9) target = $region8
  $region5: #{position_embeddings_fwd.1} parent=0 // loop_body
    %s13 = ssub.s32 %s8, 1
    %s14 = ssub.s32 %s8, 2
    %s21 = sadd.s32 1, %s16
    %p22 = scmp.ge.s32.totalorder %s21, 2
    %s23 = scalar_select %p22, 0, %s21
    %s24 = sadd.s32 1, %s15
    %s25 = scalar_select %p22, %s24, %s15
    %p26 = scmp.ge.s32.totalorder %s25, 1
    %s27 = scalar_select %p26, 0, %s25
    %s28 = ssub.s32 %s16, %s23
    %s29 = ssub.s32 %s15, %s27
    %s30 = sor.u32 %s28, %s29
    %p31 = scmp.eq.s32.totalorder %s30, 0
    %s33 = sadd.s32 %s32, 1
    %s34 = scalar_select %p31, %s32, %s33
    %p37 = pneg %p31
    %p38 = scmp.eq.s32.totalorder %s8, 1
    %p39 = por %p37, %p38
    %p40 = scmp.ne.s32.totalorder %s32, %s35
    %p41 = scmp.eq.s32.totalorder %s8, 0
    %p42 = por %p40, %p41
    %p43 = scmp.ne.s32.totalorder %s32, %s35
    %p44 = scmp.eq.s32.totalorder %s13, 1
    %p45 = por %p43, %p44
    %p46 = scmp.ne.s32.totalorder %s35, %s36
    %p47 = scmp.eq.s32.totalorder %s13, 0
    %p48 = por %p46, %p47
    %p49 = scmp.ne.s32.totalorder %s35, %s36
    %p50 = scmp.eq.s32.totalorder %s14, 1
    %p51 = por %p49, %p50
    %p53 = scmp.ne.s32.totalorder %s36, %s52
    %p54 = scmp.eq.s32.totalorder %s14, 0
    %p55 = por %p53, %p54
    %s56 = ssub.s32 %s15, %s27
    %p57 = scmp.eq.s32.totalorder %s56, 0
    %s59 = sadd.s32 %s58, 1
    %s60 = scalar_select %p57, %s58, %s59
    %p63 = pneg %p57
    %p64 = scmp.eq.s32.totalorder %s8, 1
    %p65 = por %p63, %p64
    %p66 = scmp.ne.s32.totalorder %s58, %s61
    %p67 = scmp.eq.s32.totalorder %s8, 0
    %p68 = por %p66, %p67
    %p69 = scmp.ne.s32.totalorder %s58, %s61
    %p70 = scmp.eq.s32.totalorder %s13, 1
    %p71 = por %p69, %p70
    %p72 = scmp.ne.s32.totalorder %s61, %s62
    %p73 = scmp.eq.s32.totalorder %s13, 0
    %p74 = por %p72, %p73
    %p75 = scmp.ne.s32.totalorder %s61, %s62
    %p76 = scmp.eq.s32.totalorder %s14, 1
    %p77 = por %p75, %p76
    %p79 = scmp.ne.s32.totalorder %s62, %s78
    %p80 = scmp.eq.s32.totalorder %s14, 0
    %p81 = por %p79, %p80
    %s82 = ssub.s32 %s16, %s23
    %s83 = ssub.s32 %s15, %s27
    %s84 = sor.u32 %s82, %s83
    %p85 = scmp.eq.s32.totalorder %s84, 0
    %s87 = sadd.s32 %s86, 1
    %s88 = scalar_select %p85, %s86, %s87
    %p91 = pneg %p85
    %p92 = scmp.eq.s32.totalorder %s8, 1
    %p93 = por %p91, %p92
    %p94 = scmp.ne.s32.totalorder %s86, %s89
    %p95 = scmp.eq.s32.totalorder %s8, 0
    %p96 = por %p94, %p95
    %p97 = scmp.ne.s32.totalorder %s86, %s89
    %p98 = scmp.eq.s32.totalorder %s13, 1
    %p99 = por %p97, %p98
    %p100 = scmp.ne.s32.totalorder %s89, %s90
    %p101 = scmp.eq.s32.totalorder %s13, 0
    %p102 = por %p100, %p101
    %p103 = scmp.ne.s32.totalorder %s89, %s90
    %p104 = scmp.eq.s32.totalorder %s14, 1
    %p105 = por %p103, %p104
    %p107 = scmp.ne.s32.totalorder %s90, %s106
    %p108 = scmp.eq.s32.totalorder %s14, 0
    %p109 = por %p107, %p108
    %p110 = scmp.le.s32.totalorder 1, %s8
    %p111 = scmp.lt.s32.totalorder %s8, 3
    %p112 = pnand %p110, %p111
    %p113 = pneg %p112
    // Predicated region
    $region9: #{position_embeddings_fwd.1} parent=5 // pred_check
      _
    $region10: #{position_embeddings_fwd.1} parent=5 // pred_check_branch
      %115 = sbr.rel (%p112) target = $region12
    $region11: #{position_embeddings_fwd.1} parent=5 // pred_region
      %s116 = ssub.s32 %s8, 1
      // Predicated region
      $region13: #{position_embeddings_fwd.1} parent=11 // pred_check
        %p117 = pneg %p74
      $region14: #{position_embeddings_fwd.1} parent=11 // pred_check_branch
        %119 = sbr.rel (%p117) target = $region16
      $region15: #{position_embeddings_fwd.1} parent=11 // pred_region
        %p120 = scmp.lt.s32.totalorder %s17, 0
        %s121 = scalar_select %p120, %s17, 0
        %s122 = smul.addr %s121, 2
        %s123 = scalar_lea.vmem %s1, %s122
      $region16: #{position_embeddings_fwd.1} parent=11 // pred_fallthru
        _
    $region12: #{position_embeddings_fwd.1} parent=5 // pred_fallthru
      _
    %p124 = scmp.lt.s32.totalorder %s8, 2
    // Predicated region
    $region17: #{position_embeddings_fwd.1} parent=5 // pred_check
      %p125 = pneg %p124
    $region18: #{position_embeddings_fwd.1} parent=5 // pred_check_branch
      %127 = sbr.rel (%p125) target = $region20
    $region19: #{position_embeddings_fwd.1} parent=5 // pred_region
      // Predicated region
      $region21: #{position_embeddings_fwd.1} parent=19 // pred_check
        %p128 = pneg %p42
      $region22: #{position_embeddings_fwd.1} parent=19 // pred_check_branch
        %130 = sbr.rel (%p128) target = $region24
      $region23: #{position_embeddings_fwd.1} parent=19 // pred_region
        %p131 = scmp.lt.s32.totalorder %s16, 1
        %s132 = scalar_select %p131, %s16, 1
        %p133 = scmp.lt.s32.totalorder %s15, 0
        %s134 = scalar_select %p133, %s15, 0
        %s135 = sadd.s32 %s134, %s132
        %s136 = smul.addr %s135, 2
        %s137 = scalar_lea.vmem %s0, %s136
      $region24: #{position_embeddings_fwd.1} parent=19 // pred_fallthru
        _
    $region20: #{position_embeddings_fwd.1} parent=5 // pred_fallthru
      _
    %p138 = scmp.le.s32.totalorder 1, %s8
    %p139 = scmp.lt.s32.totalorder %s8, 3
    %p140 = pnand %p138, %p139
    %p141 = pneg %p140
    // Predicated region
    $region25: #{position_embeddings_fwd.1} parent=5 // pred_check
      _
    $region26: #{position_embeddings_fwd.1} parent=5 // pred_check_branch
      %143 = sbr.rel (%p140) target = $region28
    $region27: #{position_embeddings_fwd.1} parent=5 // pred_region
      %s144 = ssub.s32 %s8, 1
      %p145 = scmp.lt.s32.totalorder %s18, 1
      %s146 = scalar_select %p145, %s18, 1
      %p147 = scmp.lt.s32.totalorder %s17, 0
      %s148 = scalar_select %p147, %s17, 0
      %s149 = sadd.s32 %s148, %s146
      %s150 = smul.addr %s149, 2
      %s151 = scalar_lea.vmem %s0, %s150
      %p152 = pneg %p48
      %p153 = pneg %p45
      %p154 = scmp.lt.s32.totalorder %s17, 0
      %s155 = scalar_select %p154, %s17, 0
      %s156 = smul.addr %s155, 2
      %s157 = scalar_lea.vmem %s1, %s156
      %p158 = pneg %p74
      %p159 = pneg %p71
      %p160 = pneg %p102
      %p161 = pneg %p99
      %p162 = scmp.lt.s32.totalorder %s18, 1
      %s163 = scalar_select %p162, %s18, 1
      %p164 = scmp.lt.s32.totalorder %s17, 0
      %s165 = scalar_select %p164, %s17, 0
      %s166 = sadd.s32 %s165, %s163
      %s167 = smul.addr %s166, 2
      %s168 = scalar_lea.vmem %s2, %s167
      %p169 = scmp.lt.s32.totalorder %s18, 1
      %s170 = scalar_select %p169, %s18, 1
      %p171 = scmp.lt.s32.totalorder %s17, 0
      %s172 = scalar_select %p171, %s17, 0
      %s173 = sadd.s32 %s172, %s170
      %s174 = smul.addr %s173, 2
      %s175 = scalar_lea.vmem %s0, %s174
      %p176 = scmp.lt.s32.totalorder %s17, 0
      %s177 = scalar_select %p176, %s17, 0
      %s178 = smul.addr %s177, 2
      %s179 = scalar_lea.vmem %s1, %s178
      %p180 = scmp.lt.s32.totalorder %s18, 1
      %s181 = scalar_select %p180, %s18, 1
      %p182 = scmp.lt.s32.totalorder %s17, 0
      %s183 = scalar_select %p182, %s17, 0
      %s184 = sadd.s32 %s183, %s181
      %s185 = smul.addr %s184, 2
      %s186 = scalar_lea.vmem %s2, %s185
      %v187 = vld [vmem:[%s175] sm:$0x3]
      %v188 = vld [vmem:[%s179] sm:$0x3]
      %v189 = vadd.f32 %v187, %v188
      %190 = vst [vmem:[%s186] sm:$0x3] %v189
      %p191 = scmp.lt.s32.totalorder %s18, 1
      %s192 = scalar_select %p191, %s18, 1
      %p193 = scmp.lt.s32.totalorder %s17, 0
      %s194 = scalar_select %p193, %s17, 0
      %s195 = sadd.s32 %s194, %s192
      %s196 = smul.addr %s195, 2
      %s197 = scalar_lea.vmem %s2, %s196
      // Predicated region
      $region29: #{position_embeddings_fwd.1} parent=27 // pred_check
        %p198 = pneg %p99
      $region30: #{position_embeddings_fwd.1} parent=27 // pred_check_branch
        %200 = sbr.rel (%p198) target = $region32
      $region31: #{position_embeddings_fwd.1} parent=27 // pred_region
        _
      $region32: #{position_embeddings_fwd.1} parent=27 // pred_fallthru
        _
    $region28: #{position_embeddings_fwd.1} parent=5 // pred_fallthru
      _
    %p201 = scmp.le.s32.totalorder 2, %s8
    // Predicated region
    $region33: #{position_embeddings_fwd.1} parent=5 // pred_check
      %p202 = pneg %p201
    $region34: #{position_embeddings_fwd.1} parent=5 // pred_check_branch
      %204 = sbr.rel (%p202) target = $region36
    $region35: #{position_embeddings_fwd.1} parent=5 // pred_region
      %s205 = ssub.s32 %s8, 2
      // Predicated region
      $region37: #{position_embeddings_fwd.1} parent=35 // pred_check
        %p206 = pneg %p105
      $region38: #{position_embeddings_fwd.1} parent=35 // pred_check_branch
        %208 = sbr.rel (%p206) target = $region40
      $region39: #{position_embeddings_fwd.1} parent=35 // pred_region
        %p209 = scmp.lt.s32.totalorder %s20, 1
        %s210 = scalar_select %p209, %s20, 1
        %p211 = scmp.lt.s32.totalorder %s19, 0
        %s212 = scalar_select %p211, %s19, 0
        %s213 = sadd.s32 %s212, %s210
        %s214 = smul.addr %s213, 2
        %s215 = scalar_lea.vmem %s2, %s214
      $region40: #{position_embeddings_fwd.1} parent=35 // pred_fallthru
        _
    $region36: #{position_embeddings_fwd.1} parent=5 // pred_fallthru
      _
  $region6: #{position_embeddings_fwd.1} parent=0 // loop_footer
    %s12 = sadd.s32 1, %s8
  $region7: #{position_embeddings_fwd.1} parent=0 // loop_footer_branch
    %7 = sbr.rel target = $region3
  $region8: #{position_embeddings_fwd.1} parent=0 // loop_exit
    _

</llo_original>
